<compile_context>
chip_gen: v7x
topology: tpu7x:2x2x1
jax: 0.10.0
libtpu: 0.0.40
codegen_flags: <defaults>
</compile_context>

<pallas_src>
import functools
import math

import jax
import jax.numpy as jnp
from jax.experimental import pallas as pl


def _inter_graph_transfer_kernel(x_ref, w_ref, adj_ref, o_ref, *, B, Ns, Nt):
    # x_ref  : (B*Ns, Fin)   all batches, batch folded into the M dimension
    # w_ref  : (Fin, Fout)
    # adj_ref: (Nt, Ns)
    # o_ref  : (B*Nt, Fout)
    x = x_ref[...]
    w = w_ref[...]
    adj = adj_ref[...]

    # support for every batch in a single MXU pass: (B*Ns, Fin) @ (Fin, Fout)
    support = jnp.dot(x, w, preferred_element_type=jnp.float32)

    # A normalization: softmax(relu(A), dim=-1), computed exactly once
    # (batch-invariant).  Row-max subtraction for numerical stability; an
    # all-non-positive row relus to zeros -> uniform softmax, matching torch.
    a = jnp.maximum(adj, 0.0)
    a = a - jnp.max(a, axis=-1, keepdims=True)
    e = jnp.exp(a)
    a_norm = e * pl.reciprocal(jnp.sum(e, axis=-1, keepdims=True), approx=False)

    # Per-batch A_norm @ support_b.  B is a small static Python int, so this
    # unrolls into B independent MXU calls; the result is written back with a
    # single full-ref store.
    outs = []
    for b in range(B):
        sup_b = support[b * Ns:(b + 1) * Ns, :]                 # (Ns, Fout)
        out_b = jnp.dot(a_norm, sup_b, preferred_element_type=jnp.float32)
        outs.append(jnp.maximum(out_b, 0.0))                    # ReLU (activate=True)
    out = outs[0] if B == 1 else jnp.concatenate(outs, axis=0)  # (B*Nt, Fout)

    o_ref[...] = out.astype(o_ref.dtype)
    # TODO(synk): bias=True variant (output + bias) not implemented; module default is bias=False.


def inter_graph_transfer(x, weight, adj_matrix):
    """x: [B, Ns, Fin], weight: [Fin, Fout], adj_matrix: [Nt, Ns] -> [B, Nt, Fout]."""
    B, Ns, Fin = x.shape
    Fin_w, Fout = weight.shape
    Nt, Ns_a = adj_matrix.shape
    assert Fin == Fin_w and Ns == Ns_a

    # Fold batch into the matmul M dimension (free reshape at the JAX level).
    x2d = x.reshape(B * Ns, Fin)

    kernel = functools.partial(_inter_graph_transfer_kernel, B=B, Ns=Ns, Nt=Nt)

    out2d = pl.pallas_call(
        kernel,
        out_shape=jax.ShapeDtypeStruct((B * Nt, Fout), x.dtype),
        # No grid: single invocation, every operand is a full-array VMEM block.
        in_specs=[
            pl.BlockSpec((B * Ns, Fin), lambda: (0, 0)),
            pl.BlockSpec((Fin, Fout), lambda: (0, 0)),
            pl.BlockSpec((Nt, Ns), lambda: (0, 0)),
        ],
        out_specs=pl.BlockSpec((B * Nt, Fout), lambda: (0, 0)),
    )(x2d, weight, adj_matrix)

    return out2d.reshape(B, Nt, Fout)


def _reference(x, weight, adj_matrix):
    support = jnp.einsum("bnf,fo->bno", x, weight)
    a_norm = jax.nn.softmax(jax.nn.relu(adj_matrix), axis=-1)
    out = jnp.einsum("ts,bso->bto", a_norm, support)
    return jax.nn.relu(out)


if __name__ == "__main__":
    # Small shapes consistent with the module (features scaled down).
    B = 2
    n_nodes_source = 7
    n_nodes_target = 20
    in_features = 32
    out_features = 32

    key = jax.random.PRNGKey(0)
    k_x, k_w, k_a = jax.random.split(key, 3)

    # Input graph features.
    x = jax.random.normal(k_x, (B, n_nodes_source, in_features), dtype=jnp.float32)

    # Deterministic parameter init (mirrors torch xavier_uniform_ for weight).
    bound = math.sqrt(6.0 / (in_features + out_features))
    weight = jax.random.uniform(
        k_w, (in_features, out_features), dtype=jnp.float32,
        minval=-bound, maxval=bound)
    # adj_matrix Parameter has no explicit init in the module; use a fixed random draw.
    adj_matrix = jax.random.normal(
        k_a, (n_nodes_target, n_nodes_source), dtype=jnp.float32)

    out = inter_graph_transfer(x, weight, adj_matrix)
    out = jax.block_until_ready(out)

    ref = _reference(x, weight, adj_matrix)
    assert out.shape == (B, n_nodes_target, out_features)
    assert jnp.allclose(out, ref, atol=1e-5, rtol=1e-5), "mismatch vs reference"

    print("KERNEL_OK")
</pallas_src>

<mosaic_0001>
module attributes {stable_mosaic.version = 11 : i64} {
  func.func @_inter_graph_transfer_kernel(%arg0: memref<14x32xf32, #tpu.memory_space<vmem>>, %arg1: memref<32x32xf32, #tpu.memory_space<vmem>>, %arg2: memref<20x7xf32, #tpu.memory_space<vmem>>, %arg3: memref<40x32xf32, #tpu.memory_space<vmem>>) attributes {dimension_semantics = [], scalar_prefetch = 0 : i64, scratch_operands = 0 : i64, tpu.core_type = #tpu.core_type<tc>} {
    %c0 = arith.constant 0 : index
    %c0_0 = arith.constant 0 : index
    %0 = vector.load %arg0[%c0, %c0_0] : memref<14x32xf32, #tpu.memory_space<vmem>>, vector<14x32xf32>
    %c0_1 = arith.constant 0 : index
    %c0_2 = arith.constant 0 : index
    %1 = vector.load %arg1[%c0_1, %c0_2] : memref<32x32xf32, #tpu.memory_space<vmem>>, vector<32x32xf32>
    %c0_3 = arith.constant 0 : index
    %c0_4 = arith.constant 0 : index
    %2 = vector.load %arg2[%c0_3, %c0_4] : memref<20x7xf32, #tpu.memory_space<vmem>>, vector<20x7xf32>
    %cst = arith.constant dense<0.000000e+00> : vector<14x32xf32>
    %3 = tpu.matmul %0, %1, %cst {dimension_numbers = #tpu.dot_dimension_numbers<[1], [0], [0], [1], [0, 0, 1, 1], [], []>} : vector<14x32xf32>, vector<32x32xf32>, vector<14x32xf32> -> vector<14x32xf32>
    %cst_5 = arith.constant 0.000000e+00 : f32
    %4 = vector.broadcast %cst_5 : f32 to vector<20x7xf32>
    %5 = arith.maximumf %2, %4 : vector<20x7xf32>
    %cst_6 = arith.constant dense<0xFF800000> : vector<20xf32>
    %6 = vector.multi_reduction <maximumf>, %5, %cst_6 [1] : vector<20x7xf32> to vector<20xf32>
    %7 = vector.shape_cast %6 : vector<20xf32> to vector<20x1xf32>
    %8 = vector.broadcast %7 : vector<20x1xf32> to vector<20x7xf32>
    %9 = arith.subf %5, %8 : vector<20x7xf32>
    %10 = math.exp %9 : vector<20x7xf32>
    %cst_7 = arith.constant dense<0.000000e+00> : vector<20xf32>
    %11 = vector.multi_reduction <add>, %10, %cst_7 [1] : vector<20x7xf32> to vector<20xf32>
    %12 = vector.shape_cast %11 : vector<20xf32> to vector<20x1xf32>
    %13 = tpu.reciprocal %12 : vector<20x1xf32> -> vector<20x1xf32>
    %14 = vector.broadcast %13 : vector<20x1xf32> to vector<20x7xf32>
    %15 = arith.mulf %10, %14 : vector<20x7xf32>
    %16 = vector.extract_strided_slice %3 {offsets = [0, 0], sizes = [7, 32], strides = [1, 1]} : vector<14x32xf32> to vector<7x32xf32>
    %cst_8 = arith.constant dense<0.000000e+00> : vector<20x32xf32>
    %17 = tpu.matmul %15, %16, %cst_8 {dimension_numbers = #tpu.dot_dimension_numbers<[1], [0], [0], [1], [0, 0, 1, 1], [], []>} : vector<20x7xf32>, vector<7x32xf32>, vector<20x32xf32> -> vector<20x32xf32>
    %cst_9 = arith.constant 0.000000e+00 : f32
    %18 = vector.broadcast %cst_9 : f32 to vector<20x32xf32>
    %19 = arith.maximumf %17, %18 : vector<20x32xf32>
    %20 = vector.extract_strided_slice %3 {offsets = [7, 0], sizes = [7, 32], strides = [1, 1]} : vector<14x32xf32> to vector<7x32xf32>
    %cst_10 = arith.constant dense<0.000000e+00> : vector<20x32xf32>
    %21 = tpu.matmul %15, %20, %cst_10 {dimension_numbers = #tpu.dot_dimension_numbers<[1], [0], [0], [1], [0, 0, 1, 1], [], []>} : vector<20x7xf32>, vector<7x32xf32>, vector<20x32xf32> -> vector<20x32xf32>
    %cst_11 = arith.constant 0.000000e+00 : f32
    %22 = vector.broadcast %cst_11 : f32 to vector<20x32xf32>
    %23 = arith.maximumf %21, %22 : vector<20x32xf32>
    %24 = tpu.concatenate %19, %23 in 0 : vector<20x32xf32>, vector<20x32xf32> -> vector<40x32xf32>
    %c0_12 = arith.constant 0 : index
    %c0_13 = arith.constant 0 : index
    %25 = vector.load %arg3[%c0_12, %c0_13] : memref<40x32xf32, #tpu.memory_space<vmem>>, vector<40x32xf32>
    tpu.vector_store %arg3[%c0_12, %c0_13], %24 {strides = array<i32>} : memref<40x32xf32, #tpu.memory_space<vmem>>, vector<40x32xf32>,
    return
  }
}

</mosaic_0001>

<llo_original>
// kernel: tpu_custom_call.1
$region0: #{tpu_custom_call.1}
  #allocation0 [shape = 'u32[]', space=smem, size = 0x4, offset = 0x4, fixed_abs, tag = 'smem constant byte address 0x4 - core index']
  #allocation1 [shape = 'u32[144,128]{1,0:T(1,128)}', space=vmem, size = 0x12000, scoped, tag = 'internal scratch']
  %s0 = inlined_call_operand.hbm [shape: f32[14,32], index: 0, kind: input, shape index: {}]
  %s1 = inlined_call_operand.vmem [shape: f32[32,32], index: 1, kind: input, shape index: {}]
  %s2 = inlined_call_operand.vmem [shape: f32[20,7], index: 2, kind: input, shape index: {}]
  %s3 = inlined_call_operand.vmem [shape: f32[40,32], index: 3, kind: output, shape index: {}]
  %s4 = sld [smem:[#allocation0]]
  $region26: #{tpu_custom_call.1} parent=0
    _
  %s6 = ssub.s32 1, %s4
  %s7 = scalar_select 0, %s6, %s4
  $region1: #{tpu_custom_call.1} parent=0
    #allocation2 [shape = 'u8[8192]{0}', space=vmem, size = 0x2000, scoped, tag = 'input window, operand 0, single buffered']
    #allocation3 [shape = 's32[1]{0}', space=sflag, size = 0x4, scoped, tag = 'scoped memory for tpu_custom_call.1']
    %8 = vsyncpa [#allocation3], 0
    // Predicated region
    $region2: #{tpu_custom_call.1} parent=1 // pred_check
      _
    $region3: #{tpu_custom_call.1} parent=1 // pred_check_branch
      %10 = sbr.rel (0) target = $region5
    $region4: #{tpu_custom_call.1} parent=1 // pred_region
      %s12 = ssub.s32 256, 256
      %13 = vsyncadd [#allocation3], %s12
      %s14 = sshll.u32 [#allocation2], 4
      %s15 = int_to_ptr.vmem [resolvable:$true] %s14
      %20 = dma.hbm_to_vmem [thread:$0]  %s0, 256, %s15, [#allocation3], 128, 128, 8
    $region5: #{tpu_custom_call.1} parent=1 // pred_fallthru
      _
    // Predicated region
    $region6: #{tpu_custom_call.1} parent=1 // pred_check
      _
    $region7: #{tpu_custom_call.1} parent=1 // pred_check_branch
      %22 = sbr.rel (0) target = $region9
    $region8: #{tpu_custom_call.1} parent=1 // pred_region
      _
    $region9: #{tpu_custom_call.1} parent=1 // pred_fallthru
      _
    // Predicated region
    $region10: #{tpu_custom_call.1} parent=1 // pred_check
      _
    $region11: #{tpu_custom_call.1} parent=1 // pred_check_branch
      %24 = sbr.rel (0) target = $region13
    $region12: #{tpu_custom_call.1} parent=1 // pred_region
      _
    $region13: #{tpu_custom_call.1} parent=1 // pred_fallthru
      _
    // Predicated region
    $region14: #{tpu_custom_call.1} parent=1 // pred_check
      _
    $region15: #{tpu_custom_call.1} parent=1 // pred_check_branch
      %26 = sbr.rel (0) target = $region17
    $region16: #{tpu_custom_call.1} parent=1 // pred_region
      %27 = dma.done [#allocation3], 256
    $region17: #{tpu_custom_call.1} parent=1 // pred_fallthru
      _
    %v28 = vld [vmem:[#allocation2] sm:$0xff]
    %v29 = vld [vmem:[#allocation2 + $0x8] sm:$0x3f]
    %v30 = vld [vmem:[%s1] sm:$0xff]
    %v31 = vld [vmem:[%s1 + $0x8] sm:$0xff]
    %v32 = vld [vmem:[%s1 + $0x10] sm:$0xff]
    %v33 = vld [vmem:[%s1 + $0x18] sm:$0xff]
    %v34 = vld [vmem:[%s2] sm:$0xff]
    %v35 = vld [vmem:[%s2 + $0x8] sm:$0xff]
    %v36 = vld [vmem:[%s2 + $0x10] sm:$0xf]
    %vm37 = vcmask 261120
    %v39 = vsel %vm37, %v28, 0
    %v42 = vsel %vm37, %v29, 0
    %44 = vmatprep.subr.mxu0 0.0
    %45 = vmatpush1.msra.mxu0 %v30
    %46 = vmatprep.subr.mxu0 0.0
    %47 = vmatpush1.msra.mxu0 %v31
    %48 = vmatprep.subr.mxu0 0.0
    %49 = vmatpush1.msra.mxu0 %v32
    %50 = vmatprep.subr.mxu0 0.0
    %51 = vmatpush1.msra.mxu0 %v33
    %52 = vmatprep.subr.mxu0 0.0
    %53 = vmatpush1.msra.mxu0 0.0
    %54 = vmatprep.subr.mxu0 0.0
    %55 = vmatpush1.msra.mxu0 0.0
    %56 = vmatprep.subr.mxu0 0.0
    %57 = vmatpush1.msra.mxu0 0.0
    %58 = vmatprep.subr.mxu0 0.0
    %59 = vmatpush1.msra.mxu0 0.0
    %60 = vmatprep.subr.mxu0 0.0
    %61 = vmatpush1.msra.mxu0 0.0
    %62 = vmatprep.subr.mxu0 0.0
    %63 = vmatpush1.msra.mxu0 0.0
    %64 = vmatprep.subr.mxu0 0.0
    %65 = vmatpush1.msra.mxu0 0.0
    %66 = vmatprep.subr.mxu0 0.0
    %67 = vmatpush1.msra.mxu0 0.0
    %68 = vmatprep.subr.mxu0 0.0
    %69 = vmatpush1.msra.mxu0 0.0
    %70 = vmatprep.subr.mxu0 0.0
    %71 = vmatpush1.msra.mxu0 0.0
    %72 = vmatprep.subr.mxu0 0.0
    %73 = vmatpush1.msra.mxu0 0.0
    %74 = vmatprep.subr.mxu0 0.0
    %75 = vmatpush1.msra.mxu0 0.0
    %76 = vmatprep.subr.mxu0 0.0
    %77 = vmatpush1.msra.mxu0 0.0
    %78 = vmatprep.subr.mxu0 0.0
    %79 = vmatpush1.msra.mxu0 0.0
    %80 = vmatprep.subr.mxu0 0.0
    %81 = vmatpush1.msra.mxu0 0.0
    %82 = vmatprep.subr.mxu0 0.0
    %83 = vmatpush1.msra.mxu0 0.0
    %84 = vmatprep.subr.mxu0 0.0
    %85 = vmatpush1.msra.mxu0 0.0
    %86 = vmatprep.subr.mxu0 0.0
    %87 = vmatpush1.msra.mxu0 0.0
    %88 = vmatprep.subr.mxu0 0.0
    %89 = vmatpush1.msra.mxu0 0.0
    %90 = vmatprep.subr.mxu0 0.0
    %91 = vmatpush1.msra.mxu0 0.0
    %92 = vmatprep.subr.mxu0 0.0
    %93 = vmatpush1.msra.mxu0 0.0
    %94 = vmatprep.subr.mxu0 0.0
    %95 = vmatpush1.msra.mxu0 0.0
    %96 = vmatprep.subr.mxu0 0.0
    %97 = vmatpush1.msra.mxu0 0.0
    %98 = vmatprep.subr.mxu0 0.0
    %99 = vmatpush1.msra.mxu0 0.0
    %100 = vmatprep.subr.mxu0 0.0
    %101 = vmatpush1.msra.mxu0 0.0
    %102 = vmatprep.subr.mxu0 0.0
    %103 = vmatpush1.msra.mxu0 0.0
    %104 = vmatprep.subr.mxu0 0.0
    %105 = vmatpush1.msra.mxu0 0.0
    %106 = vmatprep.subr.mxu0 0.0
    %107 = vmatpush1.msra.mxu0 0.0
    %108 = vmatprep.mubr.f32.mxu0 0.0
    %109 = vmatmul.mubr.f32.gmra.mrb[0].mxu0 %v39
    %v110 = vpop.f32.mrb[0].mxu0
    %v111 = vadd.f32 0.0, %v110
    %v112 = vpop.f32.mrb[0].mxu0
    %113 = vmatprep.mubr.f32.mxu0 0.0
    %114 = vmatmul.mubr.f32.gmra.mrb[0].mxu0 %v42
    %v115 = vpop.f32.mrb[0].mxu0
    %v116 = vadd.f32 0.0, %v115
    %v117 = vpop.f32.mrb[0].mxu0
    %118 = vdwg.mxu0
    %v119 = vmax.f32 %v34, 0.0
    %v120 = vmax.f32 %v35, 0.0
    %v121 = vmax.f32 %v36, 0.0
    %vm122 = vcmask 56320
    %v123 = vsel %vm122, %v119, -inf
    %124 = vmax.xlane.f32.xlu0 %v123
    %v125 = vpop.xlane.xlu0 %124
    %v126 = vsel %vm122, %v120, -inf
    %127 = vmax.xlane.f32.xlu0 %v126
    %v128 = vpop.xlane.xlu0 %127
    %vm129 = vcmask 52224
    %v130 = vsel %vm129, %v121, -inf
    %131 = vmax.xlane.f32.xlu0 %v130
    %v132 = vpop.xlane.xlu0 %131
    %v133 = vsub.f32 %v119, %v125
    %v134 = vsub.f32 %v120, %v128
    %v135 = vsub.f32 %v121, %v132
    %v136 = vmul.f32 %v133, 1.442695
    %v137 = vpow.pop %v136
    %v138 = vmul.f32 %v134, 1.442695
    %v139 = vpow.pop %v138
    %v140 = vmul.f32 %v135, 1.442695
    %v141 = vpow.pop %v140
    %v142 = vsel %vm122, %v137, 0.0
    %143 = vadd.xlane.f32.xlu0 %v142
    %v144 = vpop.xlane.xlu0 %143
    %v145 = vsel %vm122, %v139, 0.0
    %146 = vadd.xlane.f32.xlu0 %v145
    %v147 = vpop.xlane.xlu0 %146
    %v148 = vsel %vm129, %v141, 0.0
    %149 = vadd.xlane.f32.xlu0 %v148
    %v150 = vpop.xlane.xlu0 %149
    %v151 = vrcp.pop %v144
    %v152 = vrcp.pop %v147
    %v153 = vrcp.pop %v150
    %v154 = vmul.f32 %v137, %v151
    %v155 = vmul.f32 %v139, %v152
    %v156 = vmul.f32 %v141, %v153
    %v158 = vsel %vm122, %v154, 0
    %v161 = vsel %vm122, %v155, 0
    %v164 = vsel %vm122, %v156, 0
    %vm166 = vcmask 1046528
    %v168 = vsel %vm166, %v111, 0
    %170 = vmatprep.subr.mxu0 0.0
    %171 = vmatpush1.msra.mxu0 %v168
    %172 = vmatprep.subr.mxu0 0.0
    %173 = vmatpush1.msra.mxu0 0.0
    %174 = vmatprep.subr.mxu0 0.0
    %175 = vmatpush1.msra.mxu0 0.0
    %176 = vmatprep.subr.mxu0 0.0
    %177 = vmatpush1.msra.mxu0 0.0
    %178 = vmatprep.subr.mxu0 0.0
    %179 = vmatpush1.msra.mxu0 0.0
    %180 = vmatprep.subr.mxu0 0.0
    %181 = vmatpush1.msra.mxu0 0.0
    %182 = vmatprep.subr.mxu0 0.0
    %183 = vmatpush1.msra.mxu0 0.0
    %184 = vmatprep.subr.mxu0 0.0
    %185 = vmatpush1.msra.mxu0 0.0
    %186 = vmatprep.subr.mxu0 0.0
    %187 = vmatpush1.msra.mxu0 0.0
    %188 = vmatprep.subr.mxu0 0.0
    %189 = vmatpush1.msra.mxu0 0.0
    %190 = vmatprep.subr.mxu0 0.0
    %191 = vmatpush1.msra.mxu0 0.0
    %192 = vmatprep.subr.mxu0 0.0
    %193 = vmatpush1.msra.mxu0 0.0
    %194 = vmatprep.subr.mxu0 0.0
    %195 = vmatpush1.msra.mxu0 0.0
    %196 = vmatprep.subr.mxu0 0.0
    %197 = vmatpush1.msra.mxu0 0.0
    %198 = vmatprep.subr.mxu0 0.0
    %199 = vmatpush1.msra.mxu0 0.0
    %200 = vmatprep.subr.mxu0 0.0
    %201 = vmatpush1.msra.mxu0 0.0
    %202 = vmatprep.subr.mxu0 0.0
    %203 = vmatpush1.msra.mxu0 0.0
    %204 = vmatprep.subr.mxu0 0.0
    %205 = vmatpush1.msra.mxu0 0.0
    %206 = vmatprep.subr.mxu0 0.0
    %207 = vmatpush1.msra.mxu0 0.0
    %208 = vmatprep.subr.mxu0 0.0
    %209 = vmatpush1.msra.mxu0 0.0
    %210 = vmatprep.subr.mxu0 0.0
    %211 = vmatpush1.msra.mxu0 0.0
    %212 = vmatprep.subr.mxu0 0.0
    %213 = vmatpush1.msra.mxu0 0.0
    %214 = vmatprep.subr.mxu0 0.0
    %215 = vmatpush1.msra.mxu0 0.0
    %216 = vmatprep.subr.mxu0 0.0
    %217 = vmatpush1.msra.mxu0 0.0
    %218 = vmatprep.subr.mxu0 0.0
    %219 = vmatpush1.msra.mxu0 0.0
    %220 = vmatprep.subr.mxu0 0.0
    %221 = vmatpush1.msra.mxu0 0.0
    %222 = vmatprep.subr.mxu0 0.0
    %223 = vmatpush1.msra.mxu0 0.0
    %224 = vmatprep.subr.mxu0 0.0
    %225 = vmatpush1.msra.mxu0 0.0
    %226 = vmatprep.subr.mxu0 0.0
    %227 = vmatpush1.msra.mxu0 0.0
    %228 = vmatprep.subr.mxu0 0.0
    %229 = vmatpush1.msra.mxu0 0.0
    %230 = vmatprep.subr.mxu0 0.0
    %231 = vmatpush1.msra.mxu0 0.0
    %232 = vmatprep.subr.mxu0 0.0
    %233 = vmatpush1.msra.mxu0 0.0
    %234 = vmatprep.mubr.f32.mxu0 0.0
    %235 = vmatmul.mubr.f32.gmra.mrb[0].mxu0 %v158
    %v236 = vpop.f32.mrb[0].mxu0
    %v237 = vadd.f32 0.0, %v236
    %v238 = vpop.f32.mrb[0].mxu0
    %239 = vmatprep.mubr.f32.mxu0 0.0
    %240 = vmatmul.mubr.f32.gmra.mrb[0].mxu0 %v161
    %v241 = vpop.f32.mrb[0].mxu0
    %v242 = vadd.f32 0.0, %v241
    %v243 = vpop.f32.mrb[0].mxu0
    %244 = vmatprep.mubr.f32.mxu0 0.0
    %245 = vmatmul.mubr.f32.gmra.mrb[0].mxu0 %v164
    %v246 = vpop.f32.mrb[0].mxu0
    %v247 = vadd.f32 0.0, %v246
    %v248 = vpop.f32.mrb[0].mxu0
    %249 = vdwg.mxu0
    %v250 = vmax.f32 %v237, 0.0
    %v251 = vmax.f32 %v242, 0.0
    %v252 = vmax.f32 %v247, 0.0
    %vm254 = vcmask 1040384
    %v255 = vrot.slane %v111, 7
    %v256 = vrot.slane %v116, 7
    %v257 = vsel %vm254, %v255, %v256
    %v258 = vsel %vm166, %v257, 0
    %260 = vmatprep.subr.mxu0 0.0
    %261 = vmatpush1.msra.mxu0 %v258
    %262 = vmatprep.subr.mxu0 0.0
    %263 = vmatpush1.msra.mxu0 0.0
    %264 = vmatprep.subr.mxu0 0.0
    %265 = vmatpush1.msra.mxu0 0.0
    %266 = vmatprep.subr.mxu0 0.0
    %267 = vmatpush1.msra.mxu0 0.0
    %268 = vmatprep.subr.mxu0 0.0
    %269 = vmatpush1.msra.mxu0 0.0
    %270 = vmatprep.subr.mxu0 0.0
    %271 = vmatpush1.msra.mxu0 0.0
    %272 = vmatprep.subr.mxu0 0.0
    %273 = vmatpush1.msra.mxu0 0.0
    %274 = vmatprep.subr.mxu0 0.0
    %275 = vmatpush1.msra.mxu0 0.0
    %276 = vmatprep.subr.mxu0 0.0
    %277 = vmatpush1.msra.mxu0 0.0
    %278 = vmatprep.subr.mxu0 0.0
    %279 = vmatpush1.msra.mxu0 0.0
    %280 = vmatprep.subr.mxu0 0.0
    %281 = vmatpush1.msra.mxu0 0.0
    %282 = vmatprep.subr.mxu0 0.0
    %283 = vmatpush1.msra.mxu0 0.0
    %284 = vmatprep.subr.mxu0 0.0
    %285 = vmatpush1.msra.mxu0 0.0
    %286 = vmatprep.subr.mxu0 0.0
    %287 = vmatpush1.msra.mxu0 0.0
    %288 = vmatprep.subr.mxu0 0.0
    %289 = vmatpush1.msra.mxu0 0.0
    %290 = vmatprep.subr.mxu0 0.0
    %291 = vmatpush1.msra.mxu0 0.0
    %292 = vmatprep.subr.mxu0 0.0
    %293 = vmatpush1.msra.mxu0 0.0
    %294 = vmatprep.subr.mxu0 0.0
    %295 = vmatpush1.msra.mxu0 0.0
    %296 = vmatprep.subr.mxu0 0.0
    %297 = vmatpush1.msra.mxu0 0.0
    %298 = vmatprep.subr.mxu0 0.0
    %299 = vmatpush1.msra.mxu0 0.0
    %300 = vmatprep.subr.mxu0 0.0
    %301 = vmatpush1.msra.mxu0 0.0
    %302 = vmatprep.subr.mxu0 0.0
    %303 = vmatpush1.msra.mxu0 0.0
    %304 = vmatprep.subr.mxu0 0.0
    %305 = vmatpush1.msra.mxu0 0.0
    %306 = vmatprep.subr.mxu0 0.0
    %307 = vmatpush1.msra.mxu0 0.0
    %308 = vmatprep.subr.mxu0 0.0
    %309 = vmatpush1.msra.mxu0 0.0
    %310 = vmatprep.subr.mxu0 0.0
    %311 = vmatpush1.msra.mxu0 0.0
    %312 = vmatprep.subr.mxu0 0.0
    %313 = vmatpush1.msra.mxu0 0.0
    %314 = vmatprep.subr.mxu0 0.0
    %315 = vmatpush1.msra.mxu0 0.0
    %316 = vmatprep.subr.mxu0 0.0
    %317 = vmatpush1.msra.mxu0 0.0
    %318 = vmatprep.subr.mxu0 0.0
    %319 = vmatpush1.msra.mxu0 0.0
    %320 = vmatprep.subr.mxu0 0.0
    %321 = vmatpush1.msra.mxu0 0.0
    %322 = vmatprep.subr.mxu0 0.0
    %323 = vmatpush1.msra.mxu0 0.0
    %324 = vmatprep.mubr.f32.mxu0 0.0
    %325 = vmatmul.mubr.f32.gmra.mrb[0].mxu0 %v158
    %v326 = vpop.f32.mrb[0].mxu0
    %v327 = vadd.f32 0.0, %v326
    %v328 = vpop.f32.mrb[0].mxu0
    %329 = vmatprep.mubr.f32.mxu0 0.0
    %330 = vmatmul.mubr.f32.gmra.mrb[0].mxu0 %v161
    %v331 = vpop.f32.mrb[0].mxu0
    %v332 = vadd.f32 0.0, %v331
    %v333 = vpop.f32.mrb[0].mxu0
    %334 = vmatprep.mubr.f32.mxu0 0.0
    %335 = vmatmul.mubr.f32.gmra.mrb[0].mxu0 %v164
    %v336 = vpop.f32.mrb[0].mxu0
    %v337 = vadd.f32 0.0, %v336
    %v338 = vpop.f32.mrb[0].mxu0
    %339 = vdwg.mxu0
    %v340 = vmax.f32 %v327, 0.0
    %v341 = vmax.f32 %v332, 0.0
    %v342 = vmax.f32 %v337, 0.0
    %vm346 = vcmask 1043456
    %v347 = vrot.slane %v340, 4
    %v348 = vrot.slane %v341, 4
    %v349 = vsel %vm346, %v347, %v348
    %v350 = vrot.slane %v342, 4
    %v351 = vsel %vm346, %v348, %v350
    %v355 = vsel %vm346, %v252, %v347
    %356 = vst.msk [vmem:[%s3] sm:$0xff] %vm37, %v250
    %357 = vst.msk [vmem:[%s3 + $0x8] sm:$0xff] %vm37, %v251
    %358 = vst.msk [vmem:[%s3 + $0x10] sm:$0xff] %vm37, %v355
    %359 = vst.msk [vmem:[%s3 + $0x18] sm:$0xff] %vm37, %v349
    %360 = vst.msk [vmem:[%s3 + $0x20] sm:$0xff] %vm37, %v351
    // Predicated region
    $region18: #{tpu_custom_call.1} parent=1 // pred_check
      _
    $region19: #{tpu_custom_call.1} parent=1 // pred_check_branch
      %362 = sbr.rel (0) target = $region21
    $region20: #{tpu_custom_call.1} parent=1 // pred_region
      _
    $region21: #{tpu_custom_call.1} parent=1 // pred_fallthru
      _
    // Predicated region
    $region22: #{tpu_custom_call.1} parent=1 // pred_check
      _
    $region23: #{tpu_custom_call.1} parent=1 // pred_check_branch
      %364 = sbr.rel (0) target = $region25
    $region24: #{tpu_custom_call.1} parent=1 // pred_region
      _
    $region25: #{tpu_custom_call.1} parent=1 // pred_fallthru
      _
    %365 = vsyncpa [#allocation3], 1

</llo_original>
